<compile_context>
chip_gen: v5e
topology: v5e:2x2
jax: 0.10.0
libtpu: 0.0.40
codegen_flags: <defaults>
</compile_context>

<pallas_src>
import jax
import jax.numpy as jnp
import numpy as np
from jax.experimental import pallas as pl
from jax.experimental.pallas import tpu as pltpu

LANE = 128          # TPU vreg lane width
PAD_THRES = 1e9     # padded neurons can never spike


# ----------------------------------------------------------------------------
# Fused kernel: one grid step == one SNN timestep.
# State carries = the VMEM-resident outputs (constant block index over grid).
# ----------------------------------------------------------------------------
def _snn_fused_kernel(x_ref, p0_ref, w1t_ref, p1_ref, sc_ref,
                      st0_init_ref, st1_init_ref,
                      st0_ref, st1_ref, v2_ref):
    f32 = jnp.float32
    t = pl.program_id(0)

    # t == 0: load the carried state into the VMEM-resident outputs.
    @pl.when(t == 0)
    def _():
        st0_ref[...] = st0_init_ref[...]
        st1_ref[...] = st1_init_ref[...]
        v2_ref[...] = jnp.full((1, 1), sc_ref[1], f32)

    x = x_ref[0]                                             # (1, n0p)

    # ---- l0 : encoding LinearLIF (per-neuron "diagonal" weights) ----------
    # p0 rows: [w, leak_i, leak_v, thres]; st0 rows: [v, i, s]
    i0n = p0_ref[1:2, :] * st0_ref[1:2, :] + p0_ref[0:1, :] * x
    v0n = p0_ref[2:3, :] * st0_ref[0:1, :] * (1.0 - st0_ref[2:3, :]) + i0n
    s0n = (v0n - p0_ref[3:4, :] > 0.0).astype(f32)
    st0_ref[0:1, :] = v0n
    st0_ref[1:2, :] = i0n
    st0_ref[2:3, :] = s0n

    # ---- l1 : hidden LinearLIF (dense feed-forward, pre-transposed W1) ----
    # p1 rows: [leak_i, leak_v, thres, w2]; st1 rows: [v, i, s]
    ff1 = jnp.dot(s0n, w1t_ref[...], preferred_element_type=f32)   # (1, Np)
    i1n = p1_ref[0:1, :] * st1_ref[1:2, :] + ff1
    v1n = p1_ref[1:2, :] * st1_ref[0:1, :] * (1.0 - st1_ref[2:3, :]) + i1n
    s1n = (v1n - p1_ref[2:3, :] > 0.0).astype(f32)
    st1_ref[0:1, :] = v1n
    st1_ref[1:2, :] = i1n
    st1_ref[2:3, :] = s1n

    # ---- l2 : Linear_LI_filter readout (no bias) ---------------------------
    ff2 = jnp.sum(p1_ref[3:4, :] * s1n, axis=-1, keepdims=True)    # (1, 1)
    v2_ref[...] = sc_ref[0] * v2_ref[...] + ff2


# ----------------------------------------------------------------------------
# One-time parameter packing / padding / weight transpose (hoisted out of the
# per-call path).
# ----------------------------------------------------------------------------
def prepare_params(params, n0, N, lane=LANE):
    f32 = jnp.float32
    n0p = ((n0 + lane - 1) // lane) * lane
    Np = ((N + lane - 1) // lane) * lane

    def pad1(v, n, total, fill=0.0):
        v = jnp.asarray(v, f32).reshape(n)
        if total == n:
            return v
        return jnp.concatenate([v, jnp.full((total - n,), fill, f32)])

    p0 = jnp.stack([
        pad1(params['l0_weights'], n0, n0p),
        pad1(params['l0_leak_i'], n0, n0p),
        pad1(params['l0_leak_v'], n0, n0p),
        pad1(params['l0_thres'], n0, n0p, PAD_THRES),
    ])                                                       # (4, n0p)

    p1 = jnp.stack([
        pad1(params['l1_leak_i'], N, Np),
        pad1(params['l1_leak_v'], N, Np),
        pad1(params['l1_thres'], N, Np, PAD_THRES),
        pad1(params['l2_weights'], N, Np),
    ])                                                       # (4, Np)

    w1 = jnp.asarray(params['l1_weights'], f32).reshape(N, n0)
    w1t = jnp.zeros((n0p, Np), f32).at[:n0, :N].set(w1.T)    # pre-transposed once

    return dict(p0=p0, p1=p1, w1t=w1t,
                l2_leak=jnp.asarray(params['l2_leak'], f32).reshape(()),
                n0=n0, N=N, n0p=n0p, Np=Np)


# ----------------------------------------------------------------------------
# Fused rollout: runs T timesteps in ONE pallas_call, returns the final states.
# ----------------------------------------------------------------------------
def snn_rollout(xs, state_l0, state_l1, state_l2, prepped):
    """xs: (T, n0) input sequence. Returns (state_l0, state_l1, state_l2)."""
    f32 = jnp.float32
    n0, N = prepped['n0'], prepped['N']
    n0p, Np = prepped['n0p'], prepped['Np']
    T = xs.shape[0]

    # Zero-pad to full 128-lane width (padded neurons never spike).
    xp = jnp.zeros((T, 1, n0p), f32).at[:, 0, :n0].set(xs.astype(f32))
    st0 = jnp.zeros((3, n0p), f32).at[:, :n0].set(jnp.asarray(state_l0, f32))
    st1 = jnp.zeros((3, Np), f32).at[:, :N].set(jnp.asarray(state_l1, f32))
    sc = jnp.stack([prepped['l2_leak'],
                    jnp.asarray(state_l2, f32).reshape(())])         # [leak, v2_init]

    smem = pl.BlockSpec(memory_space=pltpu.MemorySpace.SMEM)
    grid_spec = pltpu.PrefetchScalarGridSpec(
        num_scalar_prefetch=0,
        grid=(T,),
        in_specs=[
            pl.BlockSpec((1, 1, n0p), lambda t: (t, 0, 0)),   # x_t (per-step DMA)
            pl.BlockSpec((4, n0p), lambda t: (0, 0)),         # l0 params (resident)
            pl.BlockSpec((n0p, Np), lambda t: (0, 0)),        # W1^T      (resident)
            pl.BlockSpec((4, Np), lambda t: (0, 0)),          # l1/l2 params (resident)
            smem,                                             # [l2_leak, v2_init]
            pl.BlockSpec((3, n0p), lambda t: (0, 0)),         # initial l0 state
            pl.BlockSpec((3, Np), lambda t: (0, 0)),          # initial l1 state
        ],
        out_specs=(
            pl.BlockSpec((3, n0p), lambda t: (0, 0)),         # final l0 state
            pl.BlockSpec((3, Np), lambda t: (0, 0)),          # final l1 state
            pl.BlockSpec((1, 1), lambda t: (0, 0)),           # final l2 state
        ),
    )
    o0, o1, o2 = pl.pallas_call(
        _snn_fused_kernel,
        grid_spec=grid_spec,
        out_shape=(jax.ShapeDtypeStruct((3, n0p), f32),
                   jax.ShapeDtypeStruct((3, Np), f32),
                   jax.ShapeDtypeStruct((1, 1), f32)),
        compiler_params=pltpu.CompilerParams(
            dimension_semantics=("arbitrary",)),              # sequential state dep.
    )(xp, prepped['p0'], prepped['w1t'], prepped['p1'], sc, st0, st1)

    return o0[:, :n0], o1[:, :N], o2.reshape(1)


def encoding_l1_decoding_snn(input_, state_l0, state_l1, state_l2, prepped):
    """Module-faithful forward: one timestep using input_[0, 0, :]."""
    xs = input_[0:1, 0, :]                                    # (1, n0)
    return snn_rollout(xs, state_l0, state_l1, state_l2, prepped)


# ----------------------------------------------------------------------------
# Pure numpy reference (single step).
# ----------------------------------------------------------------------------
def _ref_step(x, st0, st1, v2, p):
    v0, i0, s0 = st0
    i0n = p['l0_leak_i'] * i0 + p['l0_weights'] * x
    v0n = p['l0_leak_v'] * v0 * (1.0 - s0) + i0n
    s0n = (v0n - p['l0_thres'] > 0.0).astype(np.float32)

    v1, i1, s1 = st1
    W1 = p['l1_weights'].reshape(st1.shape[-1], st0.shape[-1])
    ff1 = W1 @ s0n
    i1n = p['l1_leak_i'] * i1 + ff1
    v1n = p['l1_leak_v'] * v1 * (1.0 - s1) + i1n
    s1n = (v1n - p['l1_thres'] > 0.0).astype(np.float32)

    v2n = p['l2_leak'][0] * v2 + np.sum(p['l2_weights'] * s1n)
    return (np.stack([v0n, i0n, s0n]).astype(np.float32),
            np.stack([v1n, i1n, s1n]).astype(np.float32),
            np.float32(v2n))


if __name__ == "__main__":
    batch, seq, n0, N = 2, 8, 16, 32   # n0 = l0 neurons (= n_inputs), N = l1 neurons

    key = jax.random.PRNGKey(0)
    ks = jax.random.split(key, 12)
    params = {
        'l0_weights': jax.random.normal(ks[0], (n0,)) * 0.5,
        'l0_leak_i':  jax.random.uniform(ks[1], (n0,), minval=0.3, maxval=0.95),
        'l0_leak_v':  jax.random.uniform(ks[2], (n0,), minval=0.3, maxval=0.95),
        'l0_thres':   jax.random.uniform(ks[3], (n0,), minval=0.1, maxval=1.0),
        'l1_weights': jax.random.normal(ks[4], (N * n0,)) * 0.3,
        'l1_leak_i':  jax.random.uniform(ks[5], (N,), minval=0.3, maxval=0.95),
        'l1_leak_v':  jax.random.uniform(ks[6], (N,), minval=0.3, maxval=0.95),
        'l1_thres':   jax.random.uniform(ks[7], (N,), minval=0.1, maxval=1.0),
        'l2_weights': jax.random.normal(ks[8], (N,)) * 0.5,
        'l2_leak':    jax.random.uniform(ks[9], (1,), minval=0.5, maxval=0.95),
    }

    input_ = jax.random.normal(ks[10], (batch, seq, n0), dtype=jnp.float32)
    sk = jax.random.split(ks[11], 3)
    state_l0 = jnp.concatenate(
        [jax.random.normal(sk[0], (2, n0)) * 0.1, jnp.zeros((1, n0))], axis=0)
    state_l1 = jnp.concatenate(
        [jax.random.normal(sk[1], (2, N)) * 0.1, jnp.zeros((1, N))], axis=0)
    state_l2 = jax.random.normal(sk[2], (1,)) * 0.1

    # one-time packing / padding / transpose (hoisted out of the call path)
    prepped = prepare_params(params, n0, N)
    npp = {k: np.asarray(v, np.float32) for k, v in params.items()}

    # 1) module-faithful single-step forward (T = 1)
    o0, o1, o2 = encoding_l1_decoding_snn(input_, state_l0, state_l1, state_l2, prepped)
    jax.block_until_ready((o0, o1, o2))

    r0, r1, r2 = _ref_step(np.asarray(input_, np.float32)[0, 0, :],
                           np.asarray(state_l0, np.float32),
                           np.asarray(state_l1, np.float32),
                           float(np.asarray(state_l2)[0]), npp)
    assert np.allclose(np.asarray(o0), r0, atol=1e-4), "l0 state mismatch"
    assert np.allclose(np.asarray(o1), r1, atol=1e-4), "l1 state mismatch"
    assert np.allclose(np.asarray(o2), np.array([r2], np.float32), atol=1e-4), \
        "l2 state mismatch"

    # 2) fused multi-step rollout: one pallas_call covering all `seq` timesteps
    f0, f1, f2 = snn_rollout(input_[0], state_l0, state_l1, state_l2, prepped)
    jax.block_until_ready((f0, f1, f2))

    c0 = np.asarray(state_l0, np.float32)
    c1 = np.asarray(state_l1, np.float32)
    c2 = float(np.asarray(state_l2)[0])
    xs_np = np.asarray(input_, np.float32)[0]
    for t in range(seq):
        c0, c1, c2 = _ref_step(xs_np[t], c0, c1, c2, npp)
    assert np.allclose(np.asarray(f0), c0, atol=1e-4), "rollout l0 mismatch"
    assert np.allclose(np.asarray(f1), c1, atol=1e-4), "rollout l1 mismatch"
    assert np.allclose(np.asarray(f2), np.array([c2], np.float32), atol=1e-4), \
        "rollout l2 mismatch"

    print("KERNEL_OK")
</pallas_src>

<mosaic_0001>
module attributes {stable_mosaic.version = 11 : i64} {
  func.func @_snn_fused_kernel(%arg0: i32, %arg1: memref<1x1x128xf32, #tpu.memory_space<vmem>>, %arg2: memref<4x128xf32, #tpu.memory_space<vmem>>, %arg3: memref<128x128xf32, #tpu.memory_space<vmem>>, %arg4: memref<4x128xf32, #tpu.memory_space<vmem>>, %arg5: memref<2xf32, #tpu.memory_space<smem>>, %arg6: memref<3x128xf32, #tpu.memory_space<vmem>>, %arg7: memref<3x128xf32, #tpu.memory_space<vmem>>, %arg8: memref<3x128xf32, #tpu.memory_space<vmem>>, %arg9: memref<3x128xf32, #tpu.memory_space<vmem>>, %arg10: memref<1x1xf32, #tpu.memory_space<vmem>>) attributes {dimension_semantics = [#tpu.dimension_semantics<arbitrary>], iteration_bounds = array<i64: 1>, scalar_prefetch = 0 : i64, scratch_operands = 0 : i64, tpu.core_type = #tpu.core_type<tc>, window_params = [{transform_indices = @transform_0, window_bounds = array<i64: 1, 1, 128>}, {pipeline_mode = #tpu.pipeline_mode<synchronous>, transform_indices = @transform_1, window_bounds = array<i64: 4, 128>}, {pipeline_mode = #tpu.pipeline_mode<synchronous>, transform_indices = @transform_2, window_bounds = array<i64: 128, 128>}, {pipeline_mode = #tpu.pipeline_mode<synchronous>, transform_indices = @transform_3, window_bounds = array<i64: 4, 128>}, {transform_indices = @transform_4, window_bounds = array<i64: 2>}, {pipeline_mode = #tpu.pipeline_mode<synchronous>, transform_indices = @transform_5, window_bounds = array<i64: 3, 128>}, {pipeline_mode = #tpu.pipeline_mode<synchronous>, transform_indices = @transform_6, window_bounds = array<i64: 3, 128>}, {pipeline_mode = #tpu.pipeline_mode<synchronous>, transform_indices = @transform_7, window_bounds = array<i64: 3, 128>}, {pipeline_mode = #tpu.pipeline_mode<synchronous>, transform_indices = @transform_8, window_bounds = array<i64: 3, 128>}, {pipeline_mode = #tpu.pipeline_mode<synchronous>, transform_indices = @transform_9, window_bounds = array<i64: 1, 1>}]} {
    %c0_i32 = arith.constant 0 : i32
    %0 = arith.cmpi eq, %arg0, %c0_i32 : i32
    %1 = arith.extui %0 : i1 to i32
    %c0_i32_0 = arith.constant 0 : i32
    %2 = arith.cmpi ne, %1, %c0_i32_0 : i32
    scf.if %2 {
      %c0_52 = arith.constant 0 : index
      %c0_53 = arith.constant 0 : index
      %61 = vector.load %arg6[%c0_52, %c0_53] : memref<3x128xf32, #tpu.memory_space<vmem>>, vector<3x128xf32>
      %c0_54 = arith.constant 0 : index
      %c0_55 = arith.constant 0 : index
      %62 = vector.load %arg8[%c0_54, %c0_55] : memref<3x128xf32, #tpu.memory_space<vmem>>, vector<3x128xf32>
      tpu.vector_store %arg8[%c0_54, %c0_55], %61 {strides = array<i32>} : memref<3x128xf32, #tpu.memory_space<vmem>>, vector<3x128xf32>,
      %c0_56 = arith.constant 0 : index
      %c0_57 = arith.constant 0 : index
      %63 = vector.load %arg7[%c0_56, %c0_57] : memref<3x128xf32, #tpu.memory_space<vmem>>, vector<3x128xf32>
      %c0_58 = arith.constant 0 : index
      %c0_59 = arith.constant 0 : index
      %64 = vector.load %arg9[%c0_58, %c0_59] : memref<3x128xf32, #tpu.memory_space<vmem>>, vector<3x128xf32>
      tpu.vector_store %arg9[%c0_58, %c0_59], %63 {strides = array<i32>} : memref<3x128xf32, #tpu.memory_space<vmem>>, vector<3x128xf32>,
      %c1_60 = arith.constant 1 : index
      %65 = memref.load %arg5[%c1_60] : memref<2xf32, #tpu.memory_space<smem>>
      %66 = vector.broadcast %65 : f32 to vector<1x1xf32>
      %c0_61 = arith.constant 0 : index
      %c0_62 = arith.constant 0 : index
      %67 = vector.load %arg10[%c0_61, %c0_62] : memref<1x1xf32, #tpu.memory_space<vmem>>, vector<1x1xf32>
      tpu.vector_store %arg10[%c0_61, %c0_62], %66 {strides = array<i32>} : memref<1x1xf32, #tpu.memory_space<vmem>>, vector<1x1xf32>,
    } else {
    }
    %c0 = arith.constant 0 : index
    %c0_1 = arith.constant 0 : index
    %c0_2 = arith.constant 0 : index
    %3 = vector.load %arg1[%c0, %c0_1, %c0_2] : memref<1x1x128xf32, #tpu.memory_space<vmem>>, vector<1x1x128xf32>
    %4 = vector.shape_cast %3 : vector<1x1x128xf32> to vector<1x128xf32>
    %c1 = arith.constant 1 : index
    %c0_3 = arith.constant 0 : index
    %5 = vector.load %arg2[%c1, %c0_3] : memref<4x128xf32, #tpu.memory_space<vmem>>, vector<1x128xf32>
    %c1_4 = arith.constant 1 : index
    %c0_5 = arith.constant 0 : index
    %6 = vector.load %arg8[%c1_4, %c0_5] : memref<3x128xf32, #tpu.memory_space<vmem>>, vector<1x128xf32>
    %7 = arith.mulf %5, %6 : vector<1x128xf32>
    %c0_6 = arith.constant 0 : index
    %c0_7 = arith.constant 0 : index
    %8 = vector.load %arg2[%c0_6, %c0_7] : memref<4x128xf32, #tpu.memory_space<vmem>>, vector<1x128xf32>
    %9 = arith.mulf %8, %4 : vector<1x128xf32>
    %10 = arith.addf %7, %9 : vector<1x128xf32>
    %c2 = arith.constant 2 : index
    %c0_8 = arith.constant 0 : index
    %11 = vector.load %arg2[%c2, %c0_8] : memref<4x128xf32, #tpu.memory_space<vmem>>, vector<1x128xf32>
    %c0_9 = arith.constant 0 : index
    %c0_10 = arith.constant 0 : index
    %12 = vector.load %arg8[%c0_9, %c0_10] : memref<3x128xf32, #tpu.memory_space<vmem>>, vector<1x128xf32>
    %13 = arith.mulf %11, %12 : vector<1x128xf32>
    %c2_11 = arith.constant 2 : index
    %c0_12 = arith.constant 0 : index
    %14 = vector.load %arg8[%c2_11, %c0_12] : memref<3x128xf32, #tpu.memory_space<vmem>>, vector<1x128xf32>
    %cst = arith.constant 1.000000e+00 : f32
    %15 = vector.broadcast %cst : f32 to vector<1x128xf32>
    %16 = arith.subf %15, %14 : vector<1x128xf32>
    %17 = arith.mulf %13, %16 : vector<1x128xf32>
    %18 = arith.addf %17, %10 : vector<1x128xf32>
    %c3 = arith.constant 3 : index
    %c0_13 = arith.constant 0 : index
    %19 = vector.load %arg2[%c3, %c0_13] : memref<4x128xf32, #tpu.memory_space<vmem>>, vector<1x128xf32>
    %20 = arith.subf %18, %19 : vector<1x128xf32>
    %cst_14 = arith.constant 0.000000e+00 : f32
    %21 = vector.broadcast %cst_14 : f32 to vector<1x128xf32>
    %22 = arith.cmpf ogt, %20, %21 : vector<1x128xf32>
    %23 = arith.extui %22 : vector<1x128xi1> to vector<1x128xi32>
    %24 = arith.sitofp %23 : vector<1x128xi32> to vector<1x128xf32>
    %c0_15 = arith.constant 0 : index
    %c0_16 = arith.constant 0 : index
    %25 = vector.load %arg8[%c0_15, %c0_16] : memref<3x128xf32, #tpu.memory_space<vmem>>, vector<1x128xf32>
    tpu.vector_store %arg8[%c0_15, %c0_16], %18 {strides = array<i32>} : memref<3x128xf32, #tpu.memory_space<vmem>>, vector<1x128xf32>,
    %c1_17 = arith.constant 1 : index
    %c0_18 = arith.constant 0 : index
    %26 = vector.load %arg8[%c1_17, %c0_18] : memref<3x128xf32, #tpu.memory_space<vmem>>, vector<1x128xf32>
    tpu.vector_store %arg8[%c1_17, %c0_18], %10 {strides = array<i32>} : memref<3x128xf32, #tpu.memory_space<vmem>>, vector<1x128xf32>,
    %c2_19 = arith.constant 2 : index
    %c0_20 = arith.constant 0 : index
    %27 = vector.load %arg8[%c2_19, %c0_20] : memref<3x128xf32, #tpu.memory_space<vmem>>, vector<1x128xf32>
    tpu.vector_store %arg8[%c2_19, %c0_20], %24 {strides = array<i32>} : memref<3x128xf32, #tpu.memory_space<vmem>>, vector<1x128xf32>,
    %c0_21 = arith.constant 0 : index
    %c0_22 = arith.constant 0 : index
    %28 = vector.load %arg3[%c0_21, %c0_22] : memref<128x128xf32, #tpu.memory_space<vmem>>, vector<128x128xf32>
    %cst_23 = arith.constant dense<0.000000e+00> : vector<1x128xf32>
    %29 = tpu.matmul %24, %28, %cst_23 {dimension_numbers = #tpu.dot_dimension_numbers<[1], [0], [0], [1], [0, 0, 1, 1], [], []>} : vector<1x128xf32>, vector<128x128xf32>, vector<1x128xf32> -> vector<1x128xf32>
    %c0_24 = arith.constant 0 : index
    %c0_25 = arith.constant 0 : index
    %30 = vector.load %arg4[%c0_24, %c0_25] : memref<4x128xf32, #tpu.memory_space<vmem>>, vector<1x128xf32>
    %c1_26 = arith.constant 1 : index
    %c0_27 = arith.constant 0 : index
    %31 = vector.load %arg9[%c1_26, %c0_27] : memref<3x128xf32, #tpu.memory_space<vmem>>, vector<1x128xf32>
    %32 = arith.mulf %30, %31 : vector<1x128xf32>
    %33 = arith.addf %32, %29 : vector<1x128xf32>
    %c1_28 = arith.constant 1 : index
    %c0_29 = arith.constant 0 : index
    %34 = vector.load %arg4[%c1_28, %c0_29] : memref<4x128xf32, #tpu.memory_space<vmem>>, vector<1x128xf32>
    %c0_30 = arith.constant 0 : index
    %c0_31 = arith.constant 0 : index
    %35 = vector.load %arg9[%c0_30, %c0_31] : memref<3x128xf32, #tpu.memory_space<vmem>>, vector<1x128xf32>
    %36 = arith.mulf %34, %35 : vector<1x128xf32>
    %c2_32 = arith.constant 2 : index
    %c0_33 = arith.constant 0 : index
    %37 = vector.load %arg9[%c2_32, %c0_33] : memref<3x128xf32, #tpu.memory_space<vmem>>, vector<1x128xf32>
    %cst_34 = arith.constant 1.000000e+00 : f32
    %38 = vector.broadcast %cst_34 : f32 to vector<1x128xf32>
    %39 = arith.subf %38, %37 : vector<1x128xf32>
    %40 = arith.mulf %36, %39 : vector<1x128xf32>
    %41 = arith.addf %40, %33 : vector<1x128xf32>
    %c2_35 = arith.constant 2 : index
    %c0_36 = arith.constant 0 : index
    %42 = vector.load %arg4[%c2_35, %c0_36] : memref<4x128xf32, #tpu.memory_space<vmem>>, vector<1x128xf32>
    %43 = arith.subf %41, %42 : vector<1x128xf32>
    %cst_37 = arith.constant 0.000000e+00 : f32
    %44 = vector.broadcast %cst_37 : f32 to vector<1x128xf32>
    %45 = arith.cmpf ogt, %43, %44 : vector<1x128xf32>
    %46 = arith.extui %45 : vector<1x128xi1> to vector<1x128xi32>
    %47 = arith.sitofp %46 : vector<1x128xi32> to vector<1x128xf32>
    %c0_38 = arith.constant 0 : index
    %c0_39 = arith.constant 0 : index
    %48 = vector.load %arg9[%c0_38, %c0_39] : memref<3x128xf32, #tpu.memory_space<vmem>>, vector<1x128xf32>
    tpu.vector_store %arg9[%c0_38, %c0_39], %41 {strides = array<i32>} : memref<3x128xf32, #tpu.memory_space<vmem>>, vector<1x128xf32>,
    %c1_40 = arith.constant 1 : index
    %c0_41 = arith.constant 0 : index
    %49 = vector.load %arg9[%c1_40, %c0_41] : memref<3x128xf32, #tpu.memory_space<vmem>>, vector<1x128xf32>
    tpu.vector_store %arg9[%c1_40, %c0_41], %33 {strides = array<i32>} : memref<3x128xf32, #tpu.memory_space<vmem>>, vector<1x128xf32>,
    %c2_42 = arith.constant 2 : index
    %c0_43 = arith.constant 0 : index
    %50 = vector.load %arg9[%c2_42, %c0_43] : memref<3x128xf32, #tpu.memory_space<vmem>>, vector<1x128xf32>
    tpu.vector_store %arg9[%c2_42, %c0_43], %47 {strides = array<i32>} : memref<3x128xf32, #tpu.memory_space<vmem>>, vector<1x128xf32>,
    %c3_44 = arith.constant 3 : index
    %c0_45 = arith.constant 0 : index
    %51 = vector.load %arg4[%c3_44, %c0_45] : memref<4x128xf32, #tpu.memory_space<vmem>>, vector<1x128xf32>
    %52 = arith.mulf %51, %47 : vector<1x128xf32>
    %cst_46 = arith.constant dense<0.000000e+00> : vector<1xf32>
    %53 = vector.multi_reduction <add>, %52, %cst_46 [1] : vector<1x128xf32> to vector<1xf32>
    %54 = vector.shape_cast %53 : vector<1xf32> to vector<1x1xf32>
    %c0_47 = arith.constant 0 : index
    %55 = memref.load %arg5[%c0_47] : memref<2xf32, #tpu.memory_space<smem>>
    %c0_48 = arith.constant 0 : index
    %c0_49 = arith.constant 0 : index
    %56 = vector.load %arg10[%c0_48, %c0_49] : memref<1x1xf32, #tpu.memory_space<vmem>>, vector<1x1xf32>
    %57 = vector.broadcast %55 : f32 to vector<1x1xf32>
    %58 = arith.mulf %57, %56 : vector<1x1xf32>
    %59 = arith.addf %58, %54 : vector<1x1xf32>
    %c0_50 = arith.constant 0 : index
    %c0_51 = arith.constant 0 : index
    %60 = vector.load %arg10[%c0_50, %c0_51] : memref<1x1xf32, #tpu.memory_space<vmem>>, vector<1x1xf32>
    tpu.vector_store %arg10[%c0_50, %c0_51], %59 {strides = array<i32>} : memref<1x1xf32, #tpu.memory_space<vmem>>, vector<1x1xf32>,
    return
  }
  func.func @transform_0(%arg0: i32) -> (i32, i32, i32) {
    %c0_i32 = arith.constant 0 : i32
    %c0_i32_0 = arith.constant 0 : i32
    %c0_i32_1 = arith.constant 0 : i32
    return %arg0, %c0_i32, %c0_i32_0 : i32, i32, i32
  }
  func.func @transform_1(%arg0: i32) -> (i32, i32) {
    %c0_i32 = arith.constant 0 : i32
    %c0_i32_0 = arith.constant 0 : i32
    %c0_i32_1 = arith.constant 0 : i32
    return %c0_i32, %c0_i32_0 : i32, i32
  }
  func.func @transform_2(%arg0: i32) -> (i32, i32) {
    %c0_i32 = arith.constant 0 : i32
    %c0_i32_0 = arith.constant 0 : i32
    %c0_i32_1 = arith.constant 0 : i32
    return %c0_i32, %c0_i32_0 : i32, i32
  }
  func.func @transform_3(%arg0: i32) -> (i32, i32) {
    %c0_i32 = arith.constant 0 : i32
    %c0_i32_0 = arith.constant 0 : i32
    %c0_i32_1 = arith.constant 0 : i32
    return %c0_i32, %c0_i32_0 : i32, i32
  }
  func.func @transform_4(%arg0: i32) -> i32 {
    %c0_i32 = arith.constant 0 : i32
    %c0_i32_0 = arith.constant 0 : i32
    return %c0_i32 : i32
  }
  func.func @transform_5(%arg0: i32) -> (i32, i32) {
    %c0_i32 = arith.constant 0 : i32
    %c0_i32_0 = arith.constant 0 : i32
    %c0_i32_1 = arith.constant 0 : i32
    return %c0_i32, %c0_i32_0 : i32, i32
  }
  func.func @transform_6(%arg0: i32) -> (i32, i32) {
    %c0_i32 = arith.constant 0 : i32
    %c0_i32_0 = arith.constant 0 : i32
    %c0_i32_1 = arith.constant 0 : i32
    return %c0_i32, %c0_i32_0 : i32, i32
  }
  func.func @transform_7(%arg0: i32) -> (i32, i32) {
    %c0_i32 = arith.constant 0 : i32
    %c0_i32_0 = arith.constant 0 : i32
    %c0_i32_1 = arith.constant 0 : i32
    return %c0_i32, %c0_i32_0 : i32, i32
  }
  func.func @transform_8(%arg0: i32) -> (i32, i32) {
    %c0_i32 = arith.constant 0 : i32
    %c0_i32_0 = arith.constant 0 : i32
    %c0_i32_1 = arith.constant 0 : i32
    return %c0_i32, %c0_i32_0 : i32, i32
  }
  func.func @transform_9(%arg0: i32) -> (i32, i32) {
    %c0_i32 = arith.constant 0 : i32
    %c0_i32_0 = arith.constant 0 : i32
    %c0_i32_1 = arith.constant 0 : i32
    return %c0_i32, %c0_i32_0 : i32, i32
  }
}

</mosaic_0001>

<llo_original>
// kernel: tpu_custom_call.1
$region0: #{tpu_custom_call.1}
  #allocation0 [shape = 'u32[]', space=smem, size = 0x4, offset = 0x4, fixed_abs, tag = 'smem constant byte address 0x4 - core index']
  #allocation1 [shape = 'u32[72,128]{1,0:T(1,128)}', space=vmem, size = 0x9000, scoped, tag = 'internal scratch']
  %s0 = inlined_call_operand.hbm [shape: f32[1,1,128], index: 0, kind: input, shape index: {}]
  %s1 = inlined_call_operand.hbm [shape: f32[4,128], index: 1, kind: input, shape index: {}]
  %s2 = inlined_call_operand.hbm [shape: f32[128,128], index: 2, kind: input, shape index: {}]
  %s3 = inlined_call_operand.hbm [shape: f32[4,128], index: 3, kind: input, shape index: {}]
  %s4 = inlined_call_operand.hbm [shape: f32[2], index: 4, kind: input, shape index: {}]
  %s5 = inlined_call_operand.vmem [shape: f32[3,128], index: 5, kind: input, shape index: {}]
  %s6 = inlined_call_operand.hbm [shape: f32[3,128], index: 6, kind: input, shape index: {}]
  %s7 = inlined_call_operand.hbm [shape: f32[3,128], index: 7, kind: output, shape index: {0}]
  %s8 = inlined_call_operand.hbm [shape: f32[3,128], index: 8, kind: output, shape index: {1}]
  %s9 = inlined_call_operand.hbm [shape: f32[1,1], index: 9, kind: output, shape index: {2}]
  %10 = xla_tuple %s7, %s8, %s9
  %s11 = sld [smem:[#allocation0]]
  $region82: #{tpu_custom_call.1} parent=0
    _
  %s13 = ssub.s32 1, %s11
  %s14 = scalar_select 0, %s13, %s11
  $region1: #{tpu_custom_call.1} parent=0
    #allocation2 [shape = 'u8[512]{0}', space=vmem, size = 0x400, scoped, tag = 'input window, operand 0, single buffered']
    #allocation3 [shape = 's32[1]{0}', space=sflag, size = 0x4, scoped, tag = 'scoped memory for tpu_custom_call.1']
    #allocation4 [shape = 's32[1]{0}', space=sflag, size = 0x4, scoped, tag = 'scoped memory for tpu_custom_call.1']
    #allocation5 [shape = 's32[1]{0}', space=sflag, size = 0x4, scoped, tag = 'scoped memory for tpu_custom_call.1']
    #allocation6 [shape = 'u8[2048]{0}', space=vmem, size = 0x800, scoped, tag = 'input window, operand 1, single buffered']
    #allocation7 [shape = 's32[1]{0}', space=sflag, size = 0x4, scoped, tag = 'scoped memory for tpu_custom_call.1']
    #allocation8 [shape = 'u8[65536]{0}', space=vmem, size = 0x10000, scoped, tag = 'input window, operand 2, single buffered']
    #allocation9 [shape = 'u8[2048]{0}', space=vmem, size = 0x800, scoped, tag = 'input window, operand 3, single buffered']
    #allocation10 [shape = 's32[1]{0}', space=sflag, size = 0x4, scoped, tag = 'scoped memory for tpu_custom_call.1']
    #allocation11 [shape = 'u8[512]{0}', space=smem, size = 0x200, scoped, tag = 'input window, operand 4, single buffered']
    #allocation12 [shape = 'u8[2048]{0}', space=vmem, size = 0x800, scoped, tag = 'input window, operand 6, single buffered']
    #allocation13 [shape = 'u8[2048]{0}', space=vmem, size = 0x800, scoped, tag = 'output window, operand 0, single buffered']
    #allocation14 [shape = 'u8[2048]{0}', space=vmem, size = 0x800, scoped, tag = 'output window, operand 1, single buffered']
    #allocation15 [shape = 's32[1]{0}', space=sflag, size = 0x4, scoped, tag = 'scoped memory for tpu_custom_call.1']
    #allocation16 [shape = 'u8[512]{0}', space=vmem, size = 0x400, scoped, tag = 'output window, operand 2, single buffered']
    %15 = vsyncpa [#allocation3], 0
    %16 = vsyncpa [#allocation7], 0
    %17 = vsyncpa [#allocation10], 0
    %18 = vsyncpa [#allocation5], 0
    %19 = vsyncpa [#allocation4], 0
    %20 = vsyncpa [#allocation15], 0
    // Predicated region
    $region2: #{tpu_custom_call.1} parent=1 // pred_check
      _
    $region3: #{tpu_custom_call.1} parent=1 // pred_check_branch
      %22 = sbr.rel (0) target = $region5
    $region4: #{tpu_custom_call.1} parent=1 // pred_region
      %24 = vsyncadd [#allocation3], 0
      %s26 = sshll.u32 %s0, 4
      %s27 = int_to_ptr.hbm [resolvable:$true] %s26
      %s28 = sshll.u32 [#allocation2], 4
      %s29 = int_to_ptr.vmem [resolvable:$true] %s28
      %31 = dma.hbm_to_vmem [thread:$0]  %s27, 16, %s29, [#allocation3]
    $region5: #{tpu_custom_call.1} parent=1 // pred_fallthru
      _
    // Predicated region
    $region6: #{tpu_custom_call.1} parent=1 // pred_check
      _
    $region7: #{tpu_custom_call.1} parent=1 // pred_check_branch
      %33 = sbr.rel (0) target = $region9
    $region8: #{tpu_custom_call.1} parent=1 // pred_region
      %35 = vsyncadd [#allocation7], 0
      %s37 = sshll.u32 %s1, 4
      %s38 = int_to_ptr.hbm [resolvable:$true] %s37
      %s39 = sshll.u32 [#allocation6], 4
      %s40 = int_to_ptr.vmem [resolvable:$true] %s39
      %42 = dma.hbm_to_vmem [thread:$0]  %s38, 64, %s40, [#allocation7]
    $region9: #{tpu_custom_call.1} parent=1 // pred_fallthru
      _
    // Predicated region
    $region10: #{tpu_custom_call.1} parent=1 // pred_check
      _
    $region11: #{tpu_custom_call.1} parent=1 // pred_check_branch
      %44 = sbr.rel (0) target = $region13
    $region12: #{tpu_custom_call.1} parent=1 // pred_region
      %46 = vsyncadd [#allocation7], 0
      %s47 = sshll.u32 %s2, 4
      %s48 = int_to_ptr.hbm [resolvable:$true] %s47
      %s49 = sshll.u32 [#allocation8], 4
      %s50 = int_to_ptr.vmem [resolvable:$true] %s49
      %55 = dma.hbm_to_vmem [thread:$0]  %s48, 2048, %s50, [#allocation7], 128, 128, 8
    $region13: #{tpu_custom_call.1} parent=1 // pred_fallthru
      _
    // Predicated region
    $region14: #{tpu_custom_call.1} parent=1 // pred_check
      _
    $region15: #{tpu_custom_call.1} parent=1 // pred_check_branch
      %57 = sbr.rel (0) target = $region17
    $region16: #{tpu_custom_call.1} parent=1 // pred_region
      %59 = vsyncadd [#allocation10], 0
      %s61 = sshll.u32 %s3, 4
      %s62 = int_to_ptr.hbm [resolvable:$true] %s61
      %s63 = sshll.u32 [#allocation9], 4
      %s64 = int_to_ptr.vmem [resolvable:$true] %s63
      %66 = dma.hbm_to_vmem [thread:$0]  %s62, 64, %s64, [#allocation10]
    $region17: #{tpu_custom_call.1} parent=1 // pred_fallthru
      _
    // Predicated region
    $region18: #{tpu_custom_call.1} parent=1 // pred_check
      _
    $region19: #{tpu_custom_call.1} parent=1 // pred_check_branch
      %68 = sbr.rel (0) target = $region21
    $region20: #{tpu_custom_call.1} parent=1 // pred_region
      %70 = vsyncadd [#allocation5], 0
      %s72 = sshll.u32 %s4, 4
      %s73 = int_to_ptr.hbm [resolvable:$true] %s72
      %75 = dma.hbm_to_smem %s73, 16, [#allocation11], [#allocation5]
    $region21: #{tpu_custom_call.1} parent=1 // pred_fallthru
      _
    // Predicated region
    $region22: #{tpu_custom_call.1} parent=1 // pred_check
      _
    $region23: #{tpu_custom_call.1} parent=1 // pred_check_branch
      %77 = sbr.rel (0) target = $region25
    $region24: #{tpu_custom_call.1} parent=1 // pred_region
      _
    $region25: #{tpu_custom_call.1} parent=1 // pred_fallthru
      _
    // Predicated region
    $region26: #{tpu_custom_call.1} parent=1 // pred_check
      _
    $region27: #{tpu_custom_call.1} parent=1 // pred_check_branch
      %79 = sbr.rel (0) target = $region29
    $region28: #{tpu_custom_call.1} parent=1 // pred_region
      %81 = vsyncadd [#allocation10], 0
      %s83 = sshll.u32 %s6, 4
      %s84 = int_to_ptr.hbm [resolvable:$true] %s83
      %s85 = sshll.u32 [#allocation12], 4
      %s86 = int_to_ptr.vmem [resolvable:$true] %s85
      %88 = dma.hbm_to_vmem [thread:$0]  %s84, 64, %s86, [#allocation10]
    $region29: #{tpu_custom_call.1} parent=1 // pred_fallthru
      _
    // Predicated region
    $region30: #{tpu_custom_call.1} parent=1 // pred_check
      _
    $region31: #{tpu_custom_call.1} parent=1 // pred_check_branch
      %90 = sbr.rel (0) target = $region33
    $region32: #{tpu_custom_call.1} parent=1 // pred_region
      %92 = dma.done [#allocation3], 16
    $region33: #{tpu_custom_call.1} parent=1 // pred_fallthru
      _
    // Predicated region
    $region34: #{tpu_custom_call.1} parent=1 // pred_check
      _
    $region35: #{tpu_custom_call.1} parent=1 // pred_check_branch
      %94 = sbr.rel (0) target = $region37
    $region36: #{tpu_custom_call.1} parent=1 // pred_region
      %96 = dma.done [#allocation7], 64
    $region37: #{tpu_custom_call.1} parent=1 // pred_fallthru
      _
    // Predicated region
    $region38: #{tpu_custom_call.1} parent=1 // pred_check
      _
    $region39: #{tpu_custom_call.1} parent=1 // pred_check_branch
      %98 = sbr.rel (0) target = $region41
    $region40: #{tpu_custom_call.1} parent=1 // pred_region
      %100 = dma.done [#allocation7], 2048
    $region41: #{tpu_custom_call.1} parent=1 // pred_fallthru
      _
    // Predicated region
    $region42: #{tpu_custom_call.1} parent=1 // pred_check
      _
    $region43: #{tpu_custom_call.1} parent=1 // pred_check_branch
      %102 = sbr.rel (0) target = $region45
    $region44: #{tpu_custom_call.1} parent=1 // pred_region
      %104 = dma.done [#allocation10], 64
    $region45: #{tpu_custom_call.1} parent=1 // pred_fallthru
      _
    // Predicated region
    $region46: #{tpu_custom_call.1} parent=1 // pred_check
      _
    $region47: #{tpu_custom_call.1} parent=1 // pred_check_branch
      %106 = sbr.rel (0) target = $region49
    $region48: #{tpu_custom_call.1} parent=1 // pred_region
      %108 = dma.done [#allocation5], 16
    $region49: #{tpu_custom_call.1} parent=1 // pred_fallthru
      _
    // Predicated region
    $region50: #{tpu_custom_call.1} parent=1 // pred_check
      _
    $region51: #{tpu_custom_call.1} parent=1 // pred_check_branch
      %110 = sbr.rel (0) target = $region53
    $region52: #{tpu_custom_call.1} parent=1 // pred_region
      %112 = dma.done [#allocation10], 64
    $region53: #{tpu_custom_call.1} parent=1 // pred_fallthru
      _
    %113 = sfence
    %p114 = scmp.eq.s32.totalorder 0, 0
    // Predicated region
    $region54: #{tpu_custom_call.1} parent=1 // pred_check
      %p115 = pneg %p114
    $region55: #{tpu_custom_call.1} parent=1 // pred_check_branch
      %117 = sbr.rel (%p115) target = $region57
    $region56: #{tpu_custom_call.1} parent=1 // pred_region
      %v118 = vld [vmem:[%s5] sm:$0x7]
      %119 = vst [vmem:[#allocation13] sm:$0x7] %v118
      %v120 = vld [vmem:[#allocation12] sm:$0x7]
      %121 = vst [vmem:[#allocation14] sm:$0x7] %v120
      %s122 = sld [smem:[#allocation11 + $0x1]]
      %v123 = vstv %s122
      %vm124 = vcmask 0
      %125 = vst.msk [vmem:[#allocation16] sm:$0x1] %vm124, %v123
    $region57: #{tpu_custom_call.1} parent=1 // pred_fallthru
      _
    %v126 = vld [vmem:[#allocation2] sm:$0x1]
    %v127 = vld [vmem:[#allocation6 + $0x1] sm:$0x1]
    %v128 = vld [vmem:[#allocation13 + $0x1] sm:$0x1]
    %v129 = vmul.f32 %v127, %v128
    %v130 = vld [vmem:[#allocation6] sm:$0x1]
    %v131 = vmul.f32 %v130, %v126
    %v132 = vadd.f32 %v129, %v131
    %v133 = vld [vmem:[#allocation6 + $0x2] sm:$0x1]
    %v134 = vld [vmem:[#allocation13] sm:$0x1]
    %v135 = vmul.f32 %v133, %v134
    %v136 = vld [vmem:[#allocation13 + $0x2] sm:$0x1]
    %v137 = vsub.f32 1.0, %v136
    %v138 = vmul.f32 %v135, %v137
    %v139 = vadd.f32 %v138, %v132
    %v140 = vld [vmem:[#allocation6 + $0x3] sm:$0x1]
    %v141 = vsub.f32 %v139, %v140
    %vm142 = vcmp.gt.f32.partialorder %v141, 0.0
    %v143 = vsel %vm142, 1, 0
    %v144 = vcvt.s32.f32 %v143
    %145 = vst [vmem:[#allocation13] sm:$0x1] %v139
    %146 = vst [vmem:[#allocation13 + $0x1] sm:$0x1] %v132
    %147 = vst [vmem:[#allocation13 + $0x2] sm:$0x1] %v144
    %v148 = vld [vmem:[#allocation8] sm:$0xff]
    %v149 = vld [vmem:[#allocation8 + $0x8] sm:$0xff]
    %v150 = vld [vmem:[#allocation8 + $0x10] sm:$0xff]
    %v151 = vld [vmem:[#allocation8 + $0x18] sm:$0xff]
    %v152 = vld [vmem:[#allocation8 + $0x20] sm:$0xff]
    %v153 = vld [vmem:[#allocation8 + $0x28] sm:$0xff]
    %v154 = vld [vmem:[#allocation8 + $0x30] sm:$0xff]
    %v155 = vld [vmem:[#allocation8 + $0x38] sm:$0xff]
    %v156 = vld [vmem:[#allocation8 + $0x40] sm:$0xff]
    %v157 = vld [vmem:[#allocation8 + $0x48] sm:$0xff]
    %v158 = vld [vmem:[#allocation8 + $0x50] sm:$0xff]
    %v159 = vld [vmem:[#allocation8 + $0x58] sm:$0xff]
    %v160 = vld [vmem:[#allocation8 + $0x60] sm:$0xff]
    %v161 = vld [vmem:[#allocation8 + $0x68] sm:$0xff]
    %v162 = vld [vmem:[#allocation8 + $0x70] sm:$0xff]
    %v163 = vld [vmem:[#allocation8 + $0x78] sm:$0xff]
    %164 = vmatpush.msra.mxu0 %v163
    %165 = vmatpush.msra.mxu0 %v162
    %166 = vmatpush.msra.mxu0 %v161
    %167 = vmatpush.msra.mxu0 %v160
    %168 = vmatpush.msra.mxu0 %v159
    %169 = vmatpush.msra.mxu0 %v158
    %170 = vmatpush.msra.mxu0 %v157
    %171 = vmatpush.msra.mxu0 %v156
    %172 = vmatpush.msra.mxu0 %v155
    %173 = vmatpush.msra.mxu0 %v154
    %174 = vmatpush.msra.mxu0 %v153
    %175 = vmatpush.msra.mxu0 %v152
    %176 = vmatpush.msra.mxu0 %v151
    %177 = vmatpush.msra.mxu0 %v150
    %178 = vmatpush.msra.mxu0 %v149
    %179 = vmatpush.msra.mxu0 %v148
    %180 = vmatmul.f32.gmra.mxu0 %v144
    %v181 = vpop.f32.mrf.mxu0
    %v182 = vadd.f32 0.0, %v181
    %183 = vdwg.mxu0
    %v184 = vld [vmem:[#allocation9] sm:$0x1]
    %v185 = vld [vmem:[#allocation14 + $0x1] sm:$0x1]
    %v186 = vmul.f32 %v184, %v185
    %v187 = vadd.f32 %v186, %v182
    %v188 = vld [vmem:[#allocation9 + $0x1] sm:$0x1]
    %v189 = vld [vmem:[#allocation14] sm:$0x1]
    %v190 = vmul.f32 %v188, %v189
    %v191 = vld [vmem:[#allocation14 + $0x2] sm:$0x1]
    %v192 = vsub.f32 1.0, %v191
    %v193 = vmul.f32 %v190, %v192
    %v194 = vadd.f32 %v193, %v187
    %v195 = vld [vmem:[#allocation9 + $0x2] sm:$0x1]
    %v196 = vsub.f32 %v194, %v195
    %vm197 = vcmp.gt.f32.partialorder %v196, 0.0
    %v198 = vsel %vm197, 1, 0
    %v199 = vcvt.s32.f32 %v198
    %200 = vst [vmem:[#allocation14] sm:$0x1] %v194
    %201 = vst [vmem:[#allocation14 + $0x1] sm:$0x1] %v187
    %202 = vst [vmem:[#allocation14 + $0x2] sm:$0x1] %v199
    %v203 = vld [vmem:[#allocation9 + $0x3] sm:$0x1]
    %v204 = vmul.f32 %v203, %v199
    %vm205 = vcmask 1040384
    %v206 = vsel %vm205, %v204, 0.0
    %207 = vadd.xlane.f32.xlu0 %v206
    %v208 = vpop.xlane.xlu0 %207
    %s209 = sld [smem:[#allocation11]]
    %v210 = vld [vmem:[#allocation16] sm:$0x1]
    %v211 = vstv %s209
    %v212 = vmul.f32 %v211, %v210
    %v213 = vadd.f32 %v212, %v208
    %vm214 = vcmask 0
    %215 = vst.msk [vmem:[#allocation16] sm:$0x1] %vm214, %v213
    // Predicated region
    $region58: #{tpu_custom_call.1} parent=1 // pred_check
      _
    $region59: #{tpu_custom_call.1} parent=1 // pred_check_branch
      %217 = sbr.rel (0) target = $region61
    $region60: #{tpu_custom_call.1} parent=1 // pred_region
      %219 = vsyncadd [#allocation4], 0
      %s221 = sshll.u32 [#allocation13], 4
      %s222 = int_to_ptr.vmem [resolvable:$true] %s221
      %s223 = sshll.u32 %s7, 4
      %s224 = int_to_ptr.hbm [resolvable:$true] %s223
      %226 = dma.vmem_to_hbm [thread:$0]  %s222, 64, %s224, [#allocation4]
    $region61: #{tpu_custom_call.1} parent=1 // pred_fallthru
      _
    // Predicated region
    $region62: #{tpu_custom_call.1} parent=1 // pred_check
      _
    $region63: #{tpu_custom_call.1} parent=1 // pred_check_branch
      %228 = sbr.rel (0) target = $region65
    $region64: #{tpu_custom_call.1} parent=1 // pred_region
      %230 = vsyncadd [#allocation15], 0
      %s232 = sshll.u32 [#allocation14], 4
      %s233 = int_to_ptr.vmem [resolvable:$true] %s232
      %s234 = sshll.u32 %s8, 4
      %s235 = int_to_ptr.hbm [resolvable:$true] %s234
      %237 = dma.vmem_to_hbm [thread:$0]  %s233, 64, %s235, [#allocation15]
    $region65: #{tpu_custom_call.1} parent=1 // pred_fallthru
      _
    // Predicated region
    $region66: #{tpu_custom_call.1} parent=1 // pred_check
      _
    $region67: #{tpu_custom_call.1} parent=1 // pred_check_branch
      %239 = sbr.rel (0) target = $region69
    $region68: #{tpu_custom_call.1} parent=1 // pred_region
      %241 = vsyncadd [#allocation15], 0
      %s243 = sshll.u32 [#allocation16], 4
      %s244 = int_to_ptr.vmem [resolvable:$true] %s243
      %s245 = sshll.u32 %s9, 4
      %s246 = int_to_ptr.hbm [resolvable:$true] %s245
      %248 = dma.vmem_to_hbm [thread:$0]  %s244, 16, %s246, [#allocation15]
    $region69: #{tpu_custom_call.1} parent=1 // pred_fallthru
      _
    // Predicated region
    $region70: #{tpu_custom_call.1} parent=1 // pred_check
      _
    $region71: #{tpu_custom_call.1} parent=1 // pred_check_branch
      %250 = sbr.rel (0) target = $region73
    $region72: #{tpu_custom_call.1} parent=1 // pred_region
      %252 = dma.done [#allocation4], 64
    $region73: #{tpu_custom_call.1} parent=1 // pred_fallthru
      _
    // Predicated region
    $region74: #{tpu_custom_call.1} parent=1 // pred_check
      _
    $region75: #{tpu_custom_call.1} parent=1 // pred_check_branch
      %254 = sbr.rel (0) target = $region77
    $region76: #{tpu_custom_call.1} parent=1 // pred_region
      %256 = dma.done [#allocation15], 64
    $region77: #{tpu_custom_call.1} parent=1 // pred_fallthru
      _
    // Predicated region
    $region78: #{tpu_custom_call.1} parent=1 // pred_check
      _
    $region79: #{tpu_custom_call.1} parent=1 // pred_check_branch
      %258 = sbr.rel (0) target = $region81
    $region80: #{tpu_custom_call.1} parent=1 // pred_region
      %260 = dma.done [#allocation15], 16
    $region81: #{tpu_custom_call.1} parent=1 // pred_fallthru
      _
    %261 = vsyncpa [#allocation3], 1
    %262 = vsyncpa [#allocation7], 1
    %263 = vsyncpa [#allocation10], 1
    %264 = vsyncpa [#allocation4], 1
    %265 = vsyncpa [#allocation15], 1
    %266 = vsyncpa [#allocation5], 1

</llo_original>
